<compile_context>
chip_gen: v6e
topology: v6e:2x2x1
jax: 0.10.0
libtpu: 0.0.40
codegen_flags: <defaults>
</compile_context>

<pallas_src>
import jax
import jax.numpy as jnp
from jax.experimental import pallas as pl
from jax.experimental.pallas import tpu as pltpu


# ---------------------------------------------------------------------------
# Small dense (x @ W + b) kernel, used for the hoisted i2h projection.
# ---------------------------------------------------------------------------
def _linear_kernel(x_ref, w_ref, b_ref, o_ref):
    o_ref[...] = (jnp.dot(x_ref[...], w_ref[...],
                          preferred_element_type=jnp.float32)
                  + b_ref[...]).astype(o_ref.dtype)


def _linear(x, w, b, *, block_m=512):
    """x: [M, K], w: [K, N], b: [1, N] -> [M, N] (M-tiled when divisible)."""
    M, K = x.shape
    N = w.shape[1]
    tm = block_m if (M % block_m == 0) else M   # toy sizes -> single full block
    return pl.pallas_call(
        _linear_kernel,
        out_shape=jax.ShapeDtypeStruct((M, N), jnp.float32),
        grid_spec=pltpu.PrefetchScalarGridSpec(
            num_scalar_prefetch=0,
            grid=(M // tm,),
            in_specs=[pl.BlockSpec((tm, K), lambda i: (i, 0)),
                      pl.BlockSpec((K, N), lambda i: (0, 0)),
                      pl.BlockSpec((1, N), lambda i: (0, 0))],
            out_specs=pl.BlockSpec((tm, N), lambda i: (i, 0)),
        ),
        compiler_params=pltpu.CompilerParams(
            dimension_semantics=("parallel",),
            vmem_limit_bytes=64 * 1024 * 1024),
    )(x, w, b)


# ---------------------------------------------------------------------------
# Main decode-step kernel: runs once per (batch_block, step) grid point.
# LSTM (h, c) state is carried in VMEM scratch across the "arbitrary" step axis.
# ---------------------------------------------------------------------------
def _attention_steps_kernel(batch_H_ref, proj_ref, onehot_ref,
                            wh2h_ref, bh2h_ref, wscore_ref,
                            wctx_ref, wemb_ref, whh_ref, blstm_ref,
                            hidden_out_ref,
                            h_scr, c_scr):
    step = pl.program_id(1)
    H = h_scr.shape[-1]
    cd = proj_ref.dtype   # compute dtype for the MXU/EUP-heavy attention path

    # LSTM state is zero-initialised at the first decode step of each batch block.
    @pl.when(step == 0)
    def _():
        h_scr[...] = jnp.zeros_like(h_scr)
        c_scr[...] = jnp.zeros_like(c_scr)

    h_prev = h_scr[...]                                     # [bB, H] f32
    c_prev = c_scr[...]                                     # [bB, H] f32

    # h2h: Linear(hidden, hidden) on prev hidden (f32 accumulate).
    hproj = (jnp.dot(h_prev.astype(cd), wh2h_ref[...],
                     preferred_element_type=jnp.float32)
             + bh2h_ref[...])                               # [bB, H] f32

    # Attention energies.  The tanh over [bB, T, H] is the dominant EUP op ->
    # run it in the compute dtype (bf16 on v6e/v7x halves EUP element count).
    tanh_act = jnp.tanh(proj_ref[...] + hproj.astype(cd)[:, None, :])   # [bB,T,H]

    # score: Linear(hidden, 1, bias=False) == weighted lane-reduce over H.
    e = jnp.sum(tanh_act.astype(jnp.float32) * wscore_ref[...], axis=-1)  # [bB, T]

    # softmax over T with EUP approx reciprocal for the normalisation.
    m = jnp.max(e, axis=1, keepdims=True)
    ex = jnp.exp(e - m)
    alpha = ex * pl.reciprocal(jnp.sum(ex, axis=1, keepdims=True), approx=True)

    # context = bmm(alpha^T, batch_H).squeeze(1): VPU multiply + sublane reduce
    # over T (an M=1 MXU matmul would waste the array and force relayouts).
    context = jnp.sum(alpha[:, :, None] * batch_H_ref[...].astype(jnp.float32),
                      axis=1)                               # [bB, I] f32

    # LSTMCell gates: three accumulated MXU matmuls into one f32 buffer
    # (equivalent to concat([context, onehot, h_prev]) @ W, without the concat).
    onehot = onehot_ref[step]                               # [bB, E]
    gates = (jnp.dot(context.astype(cd), wctx_ref[...],
                     preferred_element_type=jnp.float32)
             + jnp.dot(onehot, wemb_ref[...],
                       preferred_element_type=jnp.float32)
             + jnp.dot(h_prev.astype(cd), whh_ref[...],
                       preferred_element_type=jnp.float32)
             + blstm_ref[...])                              # [bB, 4H] f32

    i_g = jax.nn.sigmoid(gates[:, 0:H])
    f_g = jax.nn.sigmoid(gates[:, H:2 * H])
    g_g = jnp.tanh(gates[:, 2 * H:3 * H])
    o_g = jax.nn.sigmoid(gates[:, 3 * H:4 * H])

    c_new = f_g * c_prev + i_g * g_g
    h_new = o_g * jnp.tanh(c_new)

    h_scr[...] = h_new
    c_scr[...] = c_new
    hidden_out_ref[...] = h_new[None, :, :].astype(hidden_out_ref.dtype)


# ---------------------------------------------------------------------------
# Generator: hiddens [S, B, H] -> probs [B, S, C].  The (S, B) -> (B, S)
# permutation is folded into the output writes (static unrolled loop over the
# small step axis), so no standalone XLA transpose of the largest tensor.
# ---------------------------------------------------------------------------
def _generator_kernel(hid_ref, w_ref, b_ref, o_ref):
    S = hid_ref.shape[0]
    w = w_ref[...]
    b = b_ref[...]
    for s in range(S):                                      # S is small & static
        o_ref[:, s, :] = (jnp.dot(hid_ref[s], w,
                                  preferred_element_type=jnp.float32)
                          + b).astype(o_ref.dtype)


# ---------------------------------------------------------------------------
# Full Attention.forward (is_train=True path).
# TODO(synk): the is_train=False greedy-decode branch (argmax feedback) is not
# implemented here.
# ---------------------------------------------------------------------------
def attention_forward(batch_H, text, params, *, batch_max_length=25,
                      batch_block=None, compute_dtype=jnp.float32):
    """batch_H: [B, T, I], text: [B, >=S] int32. Returns probs [B, S, C]."""
    B, T, I = batch_H.shape
    H = params["w_h2h"].shape[0]
    E = params["w_ih"].shape[1] - I
    C = params["w_gen"].shape[0]
    S = batch_max_length + 1
    bB = B if batch_block is None else batch_block
    assert B % bB == 0
    cd = compute_dtype
    f32 = jnp.float32

    # ---- step-invariant precompute (hoisted out of the decode loop) ----
    proj = _linear(batch_H.reshape(B * T, I).astype(f32),
                   params["w_i2h"].T.astype(f32),
                   jnp.zeros((1, H), f32)).reshape(B, T, H).astype(cd)

    # teacher-forcing one-hots for every step: [S, B, E]
    onehots = jax.nn.one_hot(text[:, :S].T, E, dtype=cd)

    # ---- weight prep (pre-transposed so every kernel matmul is x @ W) ----
    w_h2h = params["w_h2h"].T.astype(cd)                    # [H, H]
    b_h2h = params["b_h2h"].reshape(1, H).astype(f32)
    w_score = params["w_score"].reshape(1, 1, H).astype(f32)
    w_ih_t = params["w_ih"].T                               # [I+E, 4H]
    w_ctx = w_ih_t[:I].astype(cd)                           # [I, 4H]
    w_emb = w_ih_t[I:I + E].astype(cd)                      # [E, 4H]
    w_hh = params["w_hh"].T.astype(cd)                      # [H, 4H]
    b_lstm = (params["b_ih"] + params["b_hh"]).reshape(1, 4 * H).astype(f32)

    flops = S * (2 * B * H * H + 4 * B * T * H + 2 * B * T * I
                 + 2 * B * (I + E + H) * 4 * H)
    transcendentals = S * (B * T * H + B * T + B + 5 * B * H)
    bytes_accessed = 4 * (B * T * (I + H) + S * B * E + H * H + 2 * H
                          + (I + E + H) * 4 * H + 4 * H + S * B * H)

    hiddens = pl.pallas_call(
        _attention_steps_kernel,
        out_shape=jax.ShapeDtypeStruct((S, B, H), cd),
        grid_spec=pltpu.PrefetchScalarGridSpec(
            num_scalar_prefetch=0,
            grid=(B // bB, S),
            in_specs=[
                pl.BlockSpec((bB, T, I), lambda b, s: (b, 0, 0)),   # batch_H (resident per b)
                pl.BlockSpec((bB, T, H), lambda b, s: (b, 0, 0)),   # proj    (resident per b)
                pl.BlockSpec((S, bB, E), lambda b, s: (0, b, 0)),   # all one-hots, 1 DMA per b
                pl.BlockSpec((H, H),     lambda b, s: (0, 0)),      # w_h2h   (resident)
                pl.BlockSpec((1, H),     lambda b, s: (0, 0)),      # b_h2h
                pl.BlockSpec((1, 1, H),  lambda b, s: (0, 0, 0)),   # w_score (pre-shaped)
                pl.BlockSpec((I, 4 * H), lambda b, s: (0, 0)),      # LSTM W (context part)
                pl.BlockSpec((E, 4 * H), lambda b, s: (0, 0)),      # LSTM W (one-hot part)
                pl.BlockSpec((H, 4 * H), lambda b, s: (0, 0)),      # LSTM W (recurrent part)
                pl.BlockSpec((1, 4 * H), lambda b, s: (0, 0)),      # fused LSTM bias
            ],
            out_specs=pl.BlockSpec((1, bB, H), lambda b, s: (s, b, 0)),
            scratch_shapes=[pltpu.VMEM((bB, H), f32),               # h carry
                            pltpu.VMEM((bB, H), f32)],              # c carry
        ),
        compiler_params=pltpu.CompilerParams(
            dimension_semantics=("parallel", "arbitrary"),
            vmem_limit_bytes=64 * 1024 * 1024),
        cost_estimate=pl.CostEstimate(flops=flops,
                                      transcendentals=transcendentals,
                                      bytes_accessed=bytes_accessed),
    )(batch_H.astype(cd), proj, onehots, w_h2h, b_h2h, w_score,
      w_ctx, w_emb, w_hh, b_lstm)

    # Generator applied once to the stacked hidden states; output written
    # directly in [B, S, C] layout (no XLA transpose of probs).
    gB = B   # production: batch-tile with gB a multiple of 8
    probs = pl.pallas_call(
        _generator_kernel,
        out_shape=jax.ShapeDtypeStruct((B, S, C), f32),
        grid_spec=pltpu.PrefetchScalarGridSpec(
            num_scalar_prefetch=0,
            grid=(B // gB,),
            in_specs=[pl.BlockSpec((S, gB, H), lambda b: (0, b, 0)),
                      pl.BlockSpec((H, C),     lambda b: (0, 0)),
                      pl.BlockSpec((1, C),     lambda b: (0, 0))],
            out_specs=pl.BlockSpec((gB, S, C), lambda b: (b, 0, 0)),
        ),
        compiler_params=pltpu.CompilerParams(
            dimension_semantics=("parallel",),
            vmem_limit_bytes=64 * 1024 * 1024),
    )(hiddens, params["w_gen"].T.astype(cd), params["b_gen"].reshape(1, C).astype(f32))
    return probs


# ---------------------------------------------------------------------------
# Pure-JAX mirror of the PyTorch Attention.forward (train mode) for checking.
# ---------------------------------------------------------------------------
def _reference_forward(batch_H, text, params, *, batch_max_length):
    B, T, I = batch_H.shape
    H = params["w_h2h"].shape[0]
    E = params["w_ih"].shape[1] - I
    S = batch_max_length + 1
    h = jnp.zeros((B, H), jnp.float32)
    c = jnp.zeros((B, H), jnp.float32)
    hiddens = []
    for i in range(S):
        onehot = jax.nn.one_hot(text[:, i], E, dtype=jnp.float32)
        proj = batch_H @ params["w_i2h"].T
        hproj = (h @ params["w_h2h"].T + params["b_h2h"])[:, None, :]
        e = jnp.tanh(proj + hproj) @ params["w_score"].T
        alpha = jax.nn.softmax(e, axis=1)
        context = jnp.einsum("bto,bti->bi", alpha, batch_H)
        concat = jnp.concatenate([context, onehot], axis=1)
        gates = (concat @ params["w_ih"].T + params["b_ih"]
                 + h @ params["w_hh"].T + params["b_hh"])
        i_g = jax.nn.sigmoid(gates[:, 0:H])
        f_g = jax.nn.sigmoid(gates[:, H:2 * H])
        g_g = jnp.tanh(gates[:, 2 * H:3 * H])
        o_g = jax.nn.sigmoid(gates[:, 3 * H:4 * H])
        c = f_g * c + i_g * g_g
        h = o_g * jnp.tanh(c)
        hiddens.append(h)
    hid = jnp.stack(hiddens, axis=1)                        # [B, S, H]
    return hid @ params["w_gen"].T + params["b_gen"]


if __name__ == "__main__":
    B, T = 2, 8
    INPUT_SIZE, HIDDEN = 32, 32
    NUM_EMB = 64            # fixed to 64 inside the PyTorch Attention module
    NUM_CLASSES = 16
    BATCH_MAX_LENGTH = 9    # num_steps = 10

    key = jax.random.PRNGKey(0)
    ks = jax.random.split(key, 12)
    params = {
        "w_i2h": 0.1 * jax.random.normal(ks[0], (HIDDEN, INPUT_SIZE), jnp.float32),
        "w_h2h": 0.1 * jax.random.normal(ks[1], (HIDDEN, HIDDEN), jnp.float32),
        "b_h2h": 0.1 * jax.random.normal(ks[2], (HIDDEN,), jnp.float32),
        "w_score": 0.1 * jax.random.normal(ks[3], (1, HIDDEN), jnp.float32),
        "w_ih": 0.1 * jax.random.normal(ks[4], (4 * HIDDEN, INPUT_SIZE + NUM_EMB), jnp.float32),
        "w_hh": 0.1 * jax.random.normal(ks[5], (4 * HIDDEN, HIDDEN), jnp.float32),
        "b_ih": 0.1 * jax.random.normal(ks[6], (4 * HIDDEN,), jnp.float32),
        "b_hh": 0.1 * jax.random.normal(ks[7], (4 * HIDDEN,), jnp.float32),
        "w_gen": 0.1 * jax.random.normal(ks[8], (NUM_CLASSES, HIDDEN), jnp.float32),
        "b_gen": 0.1 * jax.random.normal(ks[9], (NUM_CLASSES,), jnp.float32),
    }
    batch_H = jax.random.normal(ks[10], (B, T, INPUT_SIZE), jnp.float32)
    text = jax.random.randint(ks[11], (B, BATCH_MAX_LENGTH + 1), 0, NUM_EMB)

    probs = attention_forward(batch_H, text, params,
                              batch_max_length=BATCH_MAX_LENGTH,
                              compute_dtype=jnp.float32)
    jax.block_until_ready(probs)

    probs_ref = _reference_forward(batch_H, text, params,
                                   batch_max_length=BATCH_MAX_LENGTH)
    assert probs.shape == (B, BATCH_MAX_LENGTH + 1, NUM_CLASSES)
    # Tolerance slightly loosened vs. exact f32 because the softmax denominator
    # uses the EUP approximate reciprocal (pl.reciprocal(..., approx=True)).
    assert jnp.allclose(probs, probs_ref, atol=2e-3, rtol=2e-3), (
        f"mismatch, max err = {jnp.max(jnp.abs(probs - probs_ref))}")

    print("KERNEL_OK")
</pallas_src>

<mosaic_0001>
module attributes {stable_mosaic.version = 11 : i64} {
  func.func @_linear_kernel(%arg0: i32, %arg1: memref<16x32xf32, #tpu.memory_space<vmem>>, %arg2: memref<32x32xf32, #tpu.memory_space<vmem>>, %arg3: memref<1x32xf32, #tpu.memory_space<vmem>>, %arg4: memref<16x32xf32, #tpu.memory_space<vmem>>) attributes {dimension_semantics = [#tpu.dimension_semantics<parallel>], iteration_bounds = array<i64: 1>, scalar_prefetch = 0 : i64, scratch_operands = 0 : i64, tpu.core_type = #tpu.core_type<tc>, window_params = [{transform_indices = @transform_0, window_bounds = array<i64: 16, 32>}, {pipeline_mode = #tpu.pipeline_mode<synchronous>, transform_indices = @transform_1, window_bounds = array<i64: 32, 32>}, {pipeline_mode = #tpu.pipeline_mode<synchronous>, transform_indices = @transform_2, window_bounds = array<i64: 1, 32>}, {transform_indices = @transform_3, window_bounds = array<i64: 16, 32>}]} {
    %c0 = arith.constant 0 : index
    %c0_0 = arith.constant 0 : index
    %0 = vector.load %arg1[%c0, %c0_0] : memref<16x32xf32, #tpu.memory_space<vmem>>, vector<16x32xf32>
    %c0_1 = arith.constant 0 : index
    %c0_2 = arith.constant 0 : index
    %1 = vector.load %arg2[%c0_1, %c0_2] : memref<32x32xf32, #tpu.memory_space<vmem>>, vector<32x32xf32>
    %cst = arith.constant dense<0.000000e+00> : vector<16x32xf32>
    %2 = tpu.matmul %0, %1, %cst {dimension_numbers = #tpu.dot_dimension_numbers<[1], [0], [0], [1], [0, 0, 1, 1], [], []>} : vector<16x32xf32>, vector<32x32xf32>, vector<16x32xf32> -> vector<16x32xf32>
    %c0_3 = arith.constant 0 : index
    %c0_4 = arith.constant 0 : index
    %3 = vector.load %arg3[%c0_3, %c0_4] : memref<1x32xf32, #tpu.memory_space<vmem>>, vector<1x32xf32>
    %4 = vector.broadcast %3 : vector<1x32xf32> to vector<16x32xf32>
    %5 = arith.addf %2, %4 : vector<16x32xf32>
    %c0_5 = arith.constant 0 : index
    %c0_6 = arith.constant 0 : index
    %6 = vector.load %arg4[%c0_5, %c0_6] : memref<16x32xf32, #tpu.memory_space<vmem>>, vector<16x32xf32>
    tpu.vector_store %arg4[%c0_5, %c0_6], %5 {strides = array<i32>} : memref<16x32xf32, #tpu.memory_space<vmem>>, vector<16x32xf32>,
    return
  }
  func.func @transform_0(%arg0: i32) -> (i32, i32) {
    %c0_i32 = arith.constant 0 : i32
    %c0_i32_0 = arith.constant 0 : i32
    return %arg0, %c0_i32 : i32, i32
  }
  func.func @transform_1(%arg0: i32) -> (i32, i32) {
    %c0_i32 = arith.constant 0 : i32
    %c0_i32_0 = arith.constant 0 : i32
    %c0_i32_1 = arith.constant 0 : i32
    return %c0_i32, %c0_i32_0 : i32, i32
  }
  func.func @transform_2(%arg0: i32) -> (i32, i32) {
    %c0_i32 = arith.constant 0 : i32
    %c0_i32_0 = arith.constant 0 : i32
    %c0_i32_1 = arith.constant 0 : i32
    return %c0_i32, %c0_i32_0 : i32, i32
  }
  func.func @transform_3(%arg0: i32) -> (i32, i32) {
    %c0_i32 = arith.constant 0 : i32
    %c0_i32_0 = arith.constant 0 : i32
    return %arg0, %c0_i32 : i32, i32
  }
}

</mosaic_0001>

<llo_original>
// kernel: tpu_custom_call.1
$region0: #{tpu_custom_call.1}
  #allocation0 [shape = 'u32[]', space=smem, size = 0x4, offset = 0x4, fixed_abs, tag = 'smem constant byte address 0x4 - core index']
  #allocation1 [shape = 'u32[144,128]{1,0:T(1,128)}', space=vmem, size = 0x12000, scoped, tag = 'internal scratch']
  %s0 = inlined_call_operand.hbm [shape: f32[16,32], index: 0, kind: input, shape index: {}]
  %s1 = inlined_call_operand.hbm [shape: f32[32,32], index: 1, kind: input, shape index: {}]
  %s2 = inlined_call_operand.vmem [shape: f32[1,32], index: 2, kind: input, shape index: {}]
  %s3 = inlined_call_operand.hbm [shape: f32[16,32], index: 3, kind: output, shape index: {}]
  %s4 = sld [smem:[#allocation0]]
  $region30: #{tpu_custom_call.1} parent=0
    _
  %s6 = ssub.s32 1, %s4
  %s7 = scalar_select 0, %s6, %s4
  $region1: #{tpu_custom_call.1} parent=0
    #allocation2 [shape = 'u8[8192]{0}', space=vmem, size = 0x2000, scoped, tag = 'input window, operand 0, single buffered']
    #allocation3 [shape = 's32[1]{0}', space=sflag, size = 0x4, scoped, tag = 'scoped memory for tpu_custom_call.1']
    #allocation4 [shape = 's32[1]{0}', space=sflag, size = 0x4, scoped, tag = 'scoped memory for tpu_custom_call.1']
    #allocation5 [shape = 'u8[16384]{0}', space=vmem, size = 0x4000, scoped, tag = 'input window, operand 1, single buffered']
    #allocation6 [shape = 's32[1]{0}', space=sflag, size = 0x4, scoped, tag = 'scoped memory for tpu_custom_call.1']
    #allocation7 [shape = 'u8[8192]{0}', space=vmem, size = 0x2000, scoped, tag = 'output window, operand 0, single buffered']
    %8 = vsyncpa [#allocation3], 0
    %9 = vsyncpa [#allocation6], 0
    %10 = vsyncpa [#allocation4], 0
    // Predicated region
    $region2: #{tpu_custom_call.1} parent=1 // pred_check
      _
    $region3: #{tpu_custom_call.1} parent=1 // pred_check_branch
      %12 = sbr.rel (0) target = $region5
    $region4: #{tpu_custom_call.1} parent=1 // pred_region
      %s14 = ssub.s32 256, 256
      %15 = vsyncadd [#allocation3], %s14
      %s16 = sshll.u32 [#allocation2], 4
      %s17 = int_to_ptr.vmem [resolvable:$true] %s16
      %22 = dma.hbm_to_vmem [thread:$0]  %s0, 256, %s17, [#allocation3], 128, 128, 8
    $region5: #{tpu_custom_call.1} parent=1 // pred_fallthru
      _
    // Predicated region
    $region6: #{tpu_custom_call.1} parent=1 // pred_check
      _
    $region7: #{tpu_custom_call.1} parent=1 // pred_check_branch
      %24 = sbr.rel (0) target = $region9
    $region8: #{tpu_custom_call.1} parent=1 // pred_region
      %s26 = ssub.s32 512, 512
      %27 = vsyncadd [#allocation6], %s26
      %s28 = sshll.u32 [#allocation5], 4
      %s29 = int_to_ptr.vmem [resolvable:$true] %s28
      %34 = dma.hbm_to_vmem [thread:$0]  %s1, 512, %s29, [#allocation6], 128, 128, 8
    $region9: #{tpu_custom_call.1} parent=1 // pred_fallthru
      _
    // Predicated region
    $region10: #{tpu_custom_call.1} parent=1 // pred_check
      _
    $region11: #{tpu_custom_call.1} parent=1 // pred_check_branch
      %36 = sbr.rel (0) target = $region13
    $region12: #{tpu_custom_call.1} parent=1 // pred_region
      _
    $region13: #{tpu_custom_call.1} parent=1 // pred_fallthru
      _
    // Predicated region
    $region14: #{tpu_custom_call.1} parent=1 // pred_check
      _
    $region15: #{tpu_custom_call.1} parent=1 // pred_check_branch
      %38 = sbr.rel (0) target = $region17
    $region16: #{tpu_custom_call.1} parent=1 // pred_region
      %39 = dma.done [#allocation3], 256
    $region17: #{tpu_custom_call.1} parent=1 // pred_fallthru
      _
    // Predicated region
    $region18: #{tpu_custom_call.1} parent=1 // pred_check
      _
    $region19: #{tpu_custom_call.1} parent=1 // pred_check_branch
      %41 = sbr.rel (0) target = $region21
    $region20: #{tpu_custom_call.1} parent=1 // pred_region
      %42 = dma.done [#allocation6], 512
    $region21: #{tpu_custom_call.1} parent=1 // pred_fallthru
      _
    %v43 = vld [vmem:[#allocation2] sm:$0xff]
    %v44 = vld [vmem:[#allocation2 + $0x8] sm:$0xff]
    %v45 = vld [vmem:[#allocation5] sm:$0xff]
    %v46 = vld [vmem:[#allocation5 + $0x8] sm:$0xff]
    %v47 = vld [vmem:[#allocation5 + $0x10] sm:$0xff]
    %v48 = vld [vmem:[#allocation5 + $0x18] sm:$0xff]
    %v49 = vld [vmem:[%s2] sm:$0x1]
    %v51 = vlaneseq
    %v52 = vshrl.u32 %v51, 7
    %v53 = vsub.s32 0, %v52
    %v54 = vrot.slane %v49, %v53
    %vm56 = vcmask 261120
    %v58 = vsel %vm56, %v43, 0
    %v61 = vsel %vm56, %v44, 0
    %63 = vmatprep.subr.mxu0 0.0
    %64 = vmatpush1.msra.mxu0 0.0
    %65 = vmatprep.subr.mxu0 0.0
    %66 = vmatpush1.msra.mxu0 0.0
    %67 = vmatprep.subr.mxu0 0.0
    %68 = vmatpush1.msra.mxu0 0.0
    %69 = vmatprep.subr.mxu0 0.0
    %70 = vmatpush1.msra.mxu0 0.0
    %71 = vmatprep.subr.mxu0 0.0
    %72 = vmatpush1.msra.mxu0 0.0
    %73 = vmatprep.subr.mxu0 0.0
    %74 = vmatpush1.msra.mxu0 0.0
    %75 = vmatprep.subr.mxu0 0.0
    %76 = vmatpush1.msra.mxu0 0.0
    %77 = vmatprep.subr.mxu0 0.0
    %78 = vmatpush1.msra.mxu0 0.0
    %79 = vmatprep.subr.mxu0 0.0
    %80 = vmatpush1.msra.mxu0 0.0
    %81 = vmatprep.subr.mxu0 0.0
    %82 = vmatpush1.msra.mxu0 0.0
    %83 = vmatprep.subr.mxu0 0.0
    %84 = vmatpush1.msra.mxu0 0.0
    %85 = vmatprep.subr.mxu0 0.0
    %86 = vmatpush1.msra.mxu0 0.0
    %87 = vmatprep.subr.mxu0 0.0
    %88 = vmatpush1.msra.mxu0 %v48
    %89 = vmatprep.subr.mxu0 0.0
    %90 = vmatpush1.msra.mxu0 %v47
    %91 = vmatprep.subr.mxu0 0.0
    %92 = vmatpush1.msra.mxu0 %v46
    %93 = vmatprep.subr.mxu0 0.0
    %94 = vmatpush1.msra.mxu0 %v45
    %95 = vmatprep.subr.mxu0 0.0
    %96 = vmatpush2.msra.mxu0 0.0
    %97 = vmatprep.subr.mxu0 0.0
    %98 = vmatpush2.msra.mxu0 0.0
    %99 = vmatprep.subr.mxu0 0.0
    %100 = vmatpush2.msra.mxu0 0.0
    %101 = vmatprep.subr.mxu0 0.0
    %102 = vmatpush2.msra.mxu0 0.0
    %103 = vmatprep.subr.mxu0 0.0
    %104 = vmatpush2.msra.mxu0 0.0
    %105 = vmatprep.subr.mxu0 0.0
    %106 = vmatpush2.msra.mxu0 0.0
    %107 = vmatprep.subr.mxu0 0.0
    %108 = vmatpush2.msra.mxu0 0.0
    %109 = vmatprep.subr.mxu0 0.0
    %110 = vmatpush2.msra.mxu0 0.0
    %111 = vmatprep.subr.mxu0 0.0
    %112 = vmatpush2.msra.mxu0 0.0
    %113 = vmatprep.subr.mxu0 0.0
    %114 = vmatpush2.msra.mxu0 0.0
    %115 = vmatprep.subr.mxu0 0.0
    %116 = vmatpush2.msra.mxu0 0.0
    %117 = vmatprep.subr.mxu0 0.0
    %118 = vmatpush2.msra.mxu0 0.0
    %119 = vmatprep.subr.mxu0 0.0
    %120 = vmatpush2.msra.mxu0 0.0
    %121 = vmatprep.subr.mxu0 0.0
    %122 = vmatpush2.msra.mxu0 0.0
    %123 = vmatprep.subr.mxu0 0.0
    %124 = vmatpush2.msra.mxu0 0.0
    %125 = vmatprep.subr.mxu0 0.0
    %126 = vmatpush2.msra.mxu0 0.0
    %127 = vmatprep.mubr.f32.mxu0 0.0
    %128 = vmatmul.mubr.f32.gmra.mxu0 %v58
    %v129 = vpop.f32.mrf.mxu0
    %v130 = vadd.f32 %v54, %v129
    %v131 = vpop.f32.mrf.mxu0
    %132 = vmatprep.mubr.f32.mxu0 0.0
    %133 = vmatmul.mubr.f32.gmra.mxu0 %v61
    %v134 = vpop.f32.mrf.mxu0
    %v135 = vadd.f32 %v54, %v134
    %v136 = vpop.f32.mrf.mxu0
    %137 = vdwg.mxu0
    %138 = vst.msk [vmem:[#allocation7] sm:$0xff] %vm56, %v130
    %139 = vst.msk [vmem:[#allocation7 + $0x8] sm:$0xff] %vm56, %v135
    // Predicated region
    $region22: #{tpu_custom_call.1} parent=1 // pred_check
      _
    $region23: #{tpu_custom_call.1} parent=1 // pred_check_branch
      %141 = sbr.rel (0) target = $region25
    $region24: #{tpu_custom_call.1} parent=1 // pred_region
      %s143 = ssub.s32 256, 256
      %144 = vsyncadd [#allocation4], %s143
      %s145 = sshll.u32 [#allocation7], 4
      %s146 = int_to_ptr.vmem [resolvable:$true] %s145
      %151 = dma.vmem_to_hbm [thread:$0]  %s146, 256, %s3, [#allocation4], 128, 128, 8
    $region25: #{tpu_custom_call.1} parent=1 // pred_fallthru
      _
    // Predicated region
    $region26: #{tpu_custom_call.1} parent=1 // pred_check
      _
    $region27: #{tpu_custom_call.1} parent=1 // pred_check_branch
      %153 = sbr.rel (0) target = $region29
    $region28: #{tpu_custom_call.1} parent=1 // pred_region
      %154 = dma.done [#allocation4], 256
    $region29: #{tpu_custom_call.1} parent=1 // pred_fallthru
      _
    %155 = vsyncpa [#allocation3], 1
    %156 = vsyncpa [#allocation6], 1
    %157 = vsyncpa [#allocation4], 1

</llo_original>
